<compile_context>
chip_gen: v5e
topology: v5e:2x2
jax: 0.10.0
libtpu: 0.0.40
codegen_flags: <defaults>
</compile_context>

<pallas_src>
import math

import jax
import jax.numpy as jnp
from jax.experimental import pallas as pl
from jax.experimental.pallas import tpu as pltpu


def _round_up(x, m):
    return ((x + m - 1) // m) * m


def lfm_kernel(i_ref, ut_ref, bi_ref, bu_ref, o_ref):
    # MXU: (TM, D) bf16 @ (D, TN) bf16 -> (TM, TN) f32.
    scores = jnp.dot(i_ref[...], ut_ref[...], preferred_element_type=jnp.float32)
    # VPU: + item bias (TM,1) broadcast over lanes, + (user bias + mu) (1,TN)
    # broadcast over sublanes.
    o_ref[...] = scores + bi_ref[...] + bu_ref[...]


def lfm_forward(item_ids, user_ids, params, *, tm=256, tn=512):
    item_emb, user_emb, item_bias, user_bias, global_bias = params

    # Glue: embedding gathers (pure indexing). bf16 operands for the matmul;
    # biases stay f32 (they add directly into the f32 accumulator).
    # TODO(synk): move these gathers into the kernel's DMA path via
    # PrefetchScalarGridSpec (scalar-prefetched ids driving row index_maps) to
    # avoid the extra HBM round trip of the materialized gather outputs.
    I = item_emb[item_ids].astype(jnp.bfloat16)                       # (Bi, D)
    Ut = user_emb[user_ids].T.astype(jnp.bfloat16)                    # (D, Bu)
    b_i = item_bias[item_ids].astype(jnp.float32)                     # (Bi, 1)
    # Fold the global bias mu into the user-bias row.
    b_u = (user_bias[user_ids].T + global_bias).astype(jnp.float32)   # (1, Bu)

    Bi, D = I.shape
    Bu = Ut.shape[1]

    # Tile sizes: rows to sublane granularity (8), cols (lanes) to 128, then
    # pad both axes to a whole number of tiles so BlockSpecs divide evenly.
    tm = min(tm, _round_up(Bi, 8))
    tn = min(tn, _round_up(Bu, 128))
    Bi_p = _round_up(Bi, tm)
    Bu_p = _round_up(Bu, tn)

    I_p = jnp.pad(I, ((0, Bi_p - Bi), (0, 0)))
    Ut_p = jnp.pad(Ut, ((0, 0), (0, Bu_p - Bu)))
    bi_p = jnp.pad(b_i, ((0, Bi_p - Bi), (0, 0)))
    bu_p = jnp.pad(b_u, ((0, 0), (0, Bu_p - Bu)))

    grid = (Bi_p // tm, Bu_p // tn)

    out = pl.pallas_call(
        lfm_kernel,
        out_shape=jax.ShapeDtypeStruct((Bi_p, Bu_p), jnp.float32),
        grid_spec=pltpu.PrefetchScalarGridSpec(
            num_scalar_prefetch=0,
            grid=grid,
            in_specs=[
                pl.BlockSpec((tm, D), lambda i, j: (i, 0)),   # item embedding tile
                pl.BlockSpec((D, tn), lambda i, j: (0, j)),   # user embedding tile (lane-dense over Bu)
                pl.BlockSpec((tm, 1), lambda i, j: (i, 0)),   # item bias column
                pl.BlockSpec((1, tn), lambda i, j: (0, j)),   # user bias row (mu folded in)
            ],
            out_specs=pl.BlockSpec((tm, tn), lambda i, j: (i, j)),
        ),
        compiler_params=pltpu.CompilerParams(
            dimension_semantics=("parallel", "parallel"),
        ),
    )(I_p, Ut_p, bi_p, bu_p)

    return out[:Bi, :Bu]


def init_params(key, n_item, n_user, n_dim, global_bias):
    k1, k2, k3, k4 = jax.random.split(key, 4)
    # torch.nn.init.xavier_uniform_ on (rows, cols): U(-a, a), a = sqrt(6/(rows+cols))
    a_user = math.sqrt(6.0 / (n_user + n_dim))
    a_item = math.sqrt(6.0 / (n_item + n_dim))
    user_emb = jax.random.uniform(k1, (n_user, n_dim), jnp.float32, -a_user, a_user)
    item_emb = jax.random.uniform(k2, (n_item, n_dim), jnp.float32, -a_item, a_item)
    # nn.Embedding default init: N(0, 1)
    user_bias = jax.random.normal(k3, (n_user, 1), jnp.float32)
    item_bias = jax.random.normal(k4, (n_item, 1), jnp.float32)
    gb = jnp.float32(global_bias)
    return (item_emb, user_emb, item_bias, user_bias, gb)


if __name__ == "__main__":
    key = jax.random.PRNGKey(0)
    n_item, n_user, n_dim = 64, 48, 32
    global_bias = 3.5

    pkey, ikey, ukey = jax.random.split(key, 3)
    params = init_params(pkey, n_item, n_user, n_dim, global_bias)

    # Small batches of ids (like one training minibatch).
    Bi, Bu = 16, 8
    item_ids = jax.random.randint(ikey, (Bi,), 0, n_item, dtype=jnp.int32)
    user_ids = jax.random.randint(ukey, (Bu,), 0, n_user, dtype=jnp.int32)

    out = lfm_forward(item_ids, user_ids, params)
    out = jax.block_until_ready(out)

    # Reference check against plain f32 JAX (bf16 operands -> loose tolerance).
    item_emb, user_emb, item_bias, user_bias, gb = params
    ref = (item_emb[item_ids] @ user_emb[user_ids].T
           + item_bias[item_ids] + user_bias[user_ids].T + gb)
    assert out.shape == (Bi, Bu)
    assert jnp.allclose(out, ref, atol=2e-2, rtol=2e-2), float(jnp.max(jnp.abs(out - ref)))

    print("KERNEL_OK")
</pallas_src>

<mosaic_0001>
module attributes {stable_mosaic.version = 11 : i64} {
  func.func @lfm_kernel(%arg0: i32, %arg1: i32, %arg2: memref<16x32xbf16, #tpu.memory_space<vmem>>, %arg3: memref<32x128xbf16, #tpu.memory_space<vmem>>, %arg4: memref<16x1xf32, #tpu.memory_space<vmem>>, %arg5: memref<1x128xf32, #tpu.memory_space<vmem>>, %arg6: memref<16x128xf32, #tpu.memory_space<vmem>>) attributes {dimension_semantics = [#tpu.dimension_semantics<parallel>, #tpu.dimension_semantics<parallel>], iteration_bounds = array<i64: 1, 1>, scalar_prefetch = 0 : i64, scratch_operands = 0 : i64, tpu.core_type = #tpu.core_type<tc>, window_params = [{transform_indices = @transform_0, window_bounds = array<i64: 16, 32>}, {transform_indices = @transform_1, window_bounds = array<i64: 32, 128>}, {transform_indices = @transform_2, window_bounds = array<i64: 16, 1>}, {transform_indices = @transform_3, window_bounds = array<i64: 1, 128>}, {transform_indices = @transform_4, window_bounds = array<i64: 16, 128>}]} {
    %c0 = arith.constant 0 : index
    %c0_0 = arith.constant 0 : index
    %0 = vector.load %arg2[%c0, %c0_0] : memref<16x32xbf16, #tpu.memory_space<vmem>>, vector<16x32xbf16>
    %c0_1 = arith.constant 0 : index
    %c0_2 = arith.constant 0 : index
    %1 = vector.load %arg3[%c0_1, %c0_2] : memref<32x128xbf16, #tpu.memory_space<vmem>>, vector<32x128xbf16>
    %cst = arith.constant dense<0.000000e+00> : vector<16x128xf32>
    %2 = tpu.matmul %0, %1, %cst {dimension_numbers = #tpu.dot_dimension_numbers<[1], [0], [0], [1], [0, 0, 1, 1], [], []>} : vector<16x32xbf16>, vector<32x128xbf16>, vector<16x128xf32> -> vector<16x128xf32>
    %c0_3 = arith.constant 0 : index
    %c0_4 = arith.constant 0 : index
    %3 = vector.load %arg4[%c0_3, %c0_4] : memref<16x1xf32, #tpu.memory_space<vmem>>, vector<16x1xf32>
    %4 = vector.broadcast %3 : vector<16x1xf32> to vector<16x128xf32>
    %5 = arith.addf %2, %4 : vector<16x128xf32>
    %c0_5 = arith.constant 0 : index
    %c0_6 = arith.constant 0 : index
    %6 = vector.load %arg5[%c0_5, %c0_6] : memref<1x128xf32, #tpu.memory_space<vmem>>, vector<1x128xf32>
    %7 = vector.broadcast %6 : vector<1x128xf32> to vector<16x128xf32>
    %8 = arith.addf %5, %7 : vector<16x128xf32>
    %c0_7 = arith.constant 0 : index
    %c0_8 = arith.constant 0 : index
    %9 = vector.load %arg6[%c0_7, %c0_8] : memref<16x128xf32, #tpu.memory_space<vmem>>, vector<16x128xf32>
    tpu.vector_store %arg6[%c0_7, %c0_8], %8 {strides = array<i32>} : memref<16x128xf32, #tpu.memory_space<vmem>>, vector<16x128xf32>,
    return
  }
  func.func @transform_0(%arg0: i32, %arg1: i32) -> (i32, i32) {
    %c0_i32 = arith.constant 0 : i32
    %c0_i32_0 = arith.constant 0 : i32
    return %arg0, %c0_i32 : i32, i32
  }
  func.func @transform_1(%arg0: i32, %arg1: i32) -> (i32, i32) {
    %c0_i32 = arith.constant 0 : i32
    %c0_i32_0 = arith.constant 0 : i32
    return %c0_i32, %arg1 : i32, i32
  }
  func.func @transform_2(%arg0: i32, %arg1: i32) -> (i32, i32) {
    %c0_i32 = arith.constant 0 : i32
    %c0_i32_0 = arith.constant 0 : i32
    return %arg0, %c0_i32 : i32, i32
  }
  func.func @transform_3(%arg0: i32, %arg1: i32) -> (i32, i32) {
    %c0_i32 = arith.constant 0 : i32
    %c0_i32_0 = arith.constant 0 : i32
    return %c0_i32, %arg1 : i32, i32
  }
  func.func @transform_4(%arg0: i32, %arg1: i32) -> (i32, i32) {
    %c0_i32 = arith.constant 0 : i32
    return %arg0, %arg1 : i32, i32
  }
}

</mosaic_0001>

<llo_original>
// kernel: tpu_custom_call.1
$region0: #{tpu_custom_call.1}
  #allocation0 [shape = 'u32[]', space=smem, size = 0x4, offset = 0x4, fixed_abs, tag = 'smem constant byte address 0x4 - core index']
  #allocation1 [shape = 'u32[72,128]{1,0:T(1,128)}', space=vmem, size = 0x9000, scoped, tag = 'internal scratch']
  %s0 = inlined_call_operand.hbm [shape: bf16[16,32], index: 0, kind: input, shape index: {}]
  %s1 = inlined_call_operand.vmem [shape: bf16[32,128], index: 1, kind: input, shape index: {}]
  %s2 = inlined_call_operand.vmem [shape: f32[16,1], index: 2, kind: input, shape index: {}]
  %s3 = inlined_call_operand.vmem [shape: f32[1,128], index: 3, kind: input, shape index: {}]
  %s4 = inlined_call_operand.hbm [shape: f32[16,128], index: 4, kind: output, shape index: {}]
  %s5 = sld [smem:[#allocation0]]
  $region30: #{tpu_custom_call.1} parent=0
    _
  %s7 = ssub.s32 1, %s5
  %s8 = scalar_select 0, %s7, %s5
  $region1: #{tpu_custom_call.1} parent=0
    #allocation2 [shape = 'u8[4096]{0}', space=vmem, size = 0x1000, scoped, tag = 'input window, operand 0, single buffered']
    #allocation3 [shape = 's32[1]{0}', space=sflag, size = 0x4, scoped, tag = 'scoped memory for tpu_custom_call.1']
    #allocation4 [shape = 's32[1]{0}', space=sflag, size = 0x4, scoped, tag = 'scoped memory for tpu_custom_call.1']
    #allocation5 [shape = 'u8[8192]{0}', space=vmem, size = 0x2000, scoped, tag = 'output window, operand 0, single buffered']
    %9 = vsyncpa [#allocation3], 0
    %10 = vsyncpa [#allocation4], 0
    // Predicated region
    $region2: #{tpu_custom_call.1} parent=1 // pred_check
      _
    $region3: #{tpu_custom_call.1} parent=1 // pred_check_branch
      %12 = sbr.rel (0) target = $region5
    $region4: #{tpu_custom_call.1} parent=1 // pred_region
      %14 = vsyncadd [#allocation3], 0
      %s15 = sshll.u32 %s0, 4
      %s16 = int_to_ptr.hbm [resolvable:$true] %s15
      %s17 = sshll.u32 [#allocation2], 4
      %s18 = int_to_ptr.vmem [resolvable:$true] %s17
      %23 = dma.hbm_to_vmem [thread:$0]  %s16, 128, %s18, [#allocation3], 64, 64, 4
    $region5: #{tpu_custom_call.1} parent=1 // pred_fallthru
      _
    // Predicated region
    $region6: #{tpu_custom_call.1} parent=1 // pred_check
      _
    $region7: #{tpu_custom_call.1} parent=1 // pred_check_branch
      %25 = sbr.rel (0) target = $region9
    $region8: #{tpu_custom_call.1} parent=1 // pred_region
      _
    $region9: #{tpu_custom_call.1} parent=1 // pred_fallthru
      _
    // Predicated region
    $region10: #{tpu_custom_call.1} parent=1 // pred_check
      _
    $region11: #{tpu_custom_call.1} parent=1 // pred_check_branch
      %27 = sbr.rel (0) target = $region13
    $region12: #{tpu_custom_call.1} parent=1 // pred_region
      _
    $region13: #{tpu_custom_call.1} parent=1 // pred_fallthru
      _
    // Predicated region
    $region14: #{tpu_custom_call.1} parent=1 // pred_check
      _
    $region15: #{tpu_custom_call.1} parent=1 // pred_check_branch
      %29 = sbr.rel (0) target = $region17
    $region16: #{tpu_custom_call.1} parent=1 // pred_region
      _
    $region17: #{tpu_custom_call.1} parent=1 // pred_fallthru
      _
    // Predicated region
    $region18: #{tpu_custom_call.1} parent=1 // pred_check
      _
    $region19: #{tpu_custom_call.1} parent=1 // pred_check_branch
      %31 = sbr.rel (0) target = $region21
    $region20: #{tpu_custom_call.1} parent=1 // pred_region
      %33 = dma.done [#allocation3], 128
    $region21: #{tpu_custom_call.1} parent=1 // pred_fallthru
      _
    %v35 = vld [vmem:[#allocation2] sm:$0xf]
    %v36 = vld [vmem:[#allocation2 + $0x4] sm:$0xf]
    %v37 = vld [vmem:[%s1] sm:$0xf]
    %v38 = vld [vmem:[%s1 + $0x4] sm:$0xf]
    %v39 = vld [vmem:[%s1 + $0x8] sm:$0xf]
    %v40 = vld [vmem:[%s1 + $0xc] sm:$0xf]
    %v41 = vld [vmem:[%s2] sm:$0xff]
    %v42 = vld [vmem:[%s2 + $0x8] sm:$0xff]
    %44 = vset.pattern.permute.xlu0 0
    %45 = vperm.xlu0 %44, %v41
    %v46 = vpop.permute.xlu0 %45
    %49 = vset.pattern.permute.xlu0 0
    %50 = vperm.xlu0 %49, %v42
    %v51 = vpop.permute.xlu0 %50
    %v55 = vunpack.c.l.b16 %v35
    %v56 = vunpack.c.l.b16 %v36
    %v57 = vpack.c.b16 %v56, %v55
    %v62 = vunpack.c.l.b16 %v37
    %v63 = vunpack.c.l.b16 %v38
    %v64 = vunpack.c.l.b16 %v39
    %v65 = vunpack.c.l.b16 %v40
    %v66 = vpack.c.b16 %v63, %v62
    %v67 = vpack.c.b16 %v65, %v64
    %vm70 = vcmask 261120
    %v72 = vsel %vm70, %v57, 0
    %74 = vmatpush.bf16.msra.mxu0 0
    %75 = vmatpush.bf16.msra.mxu0 0
    %76 = vmatpush.bf16.msra.mxu0 0
    %77 = vmatpush.bf16.msra.mxu0 0
    %78 = vmatpush.bf16.msra.mxu0 0
    %79 = vmatpush.bf16.msra.mxu0 0
    %80 = vmatpush.bf16.msra.mxu0 %v67
    %81 = vmatpush.bf16.msra.mxu0 %v66
    %82 = vmatmul.bf16.gmra.mxu0 %v72
    %v83 = vpop.f32.mrf.mxu0
    %v84 = vadd.f32 %v46, %v83
    %v85 = vpop.f32.mrf.mxu0
    %v86 = vadd.f32 %v51, %v85
    %87 = vdwg.mxu0
    %v88 = vld [vmem:[%s3] sm:$0x1]
    %v90 = vperm.slane %v88, 0
    %v92 = vadd.f32 %v84, %v90
    %v93 = vadd.f32 %v86, %v90
    %94 = vst [vmem:[#allocation5] sm:$0xff] %v92
    %95 = vst [vmem:[#allocation5 + $0x8] sm:$0xff] %v93
    // Predicated region
    $region22: #{tpu_custom_call.1} parent=1 // pred_check
      _
    $region23: #{tpu_custom_call.1} parent=1 // pred_check_branch
      %97 = sbr.rel (0) target = $region25
    $region24: #{tpu_custom_call.1} parent=1 // pred_region
      %99 = vsyncadd [#allocation4], 0
      %s100 = sshll.u32 [#allocation5], 4
      %s101 = int_to_ptr.vmem [resolvable:$true] %s100
      %s102 = sshll.u32 %s4, 4
      %s103 = int_to_ptr.hbm [resolvable:$true] %s102
      %108 = dma.vmem_to_hbm [thread:$0]  %s101, 256, %s103, [#allocation4], 128, 128, 8
    $region25: #{tpu_custom_call.1} parent=1 // pred_fallthru
      _
    // Predicated region
    $region26: #{tpu_custom_call.1} parent=1 // pred_check
      _
    $region27: #{tpu_custom_call.1} parent=1 // pred_check_branch
      %110 = sbr.rel (0) target = $region29
    $region28: #{tpu_custom_call.1} parent=1 // pred_region
      %112 = dma.done [#allocation4], 256
    $region29: #{tpu_custom_call.1} parent=1 // pred_fallthru
      _
    %113 = vsyncpa [#allocation3], 1
    %114 = vsyncpa [#allocation4], 1

</llo_original>
